<compile_context>
chip_gen: v6e
topology: v6e:2x2x1
jax: 0.10.0
libtpu: 0.0.40
codegen_flags: <defaults>
</compile_context>

<pallas_src>
import math

import jax
import jax.numpy as jnp
from jax.experimental import pallas as pl
from jax.experimental.pallas import tpu as pltpu

_MIB = 1024 * 1024


def _round_up(a, b):
    return ((a + b - 1) // b) * b


def _tpu_vmem_budget():
    """Per-generation VMEM budget and row-tile target.

    v5e/v6e have 128 MiB VMEM (use ~100 MiB, big row tiles for v6e's
    flops/byte roofline); v7x has 64 MiB per TensorCore (stay near ~40 MiB)."""
    try:
        cap = pltpu.get_tpu_info().vmem_capacity_bytes
    except Exception:
        cap = 64 * _MIB
    if cap >= 120 * _MIB:            # v5e / v6e
        return 100 * _MIB, 768
    return 40 * _MIB, 512            # v7x


def ffn_kernel(x_ref, w1_ref, b1_ref, w2_ref, b2_ref, o_ref):
    # x_ref:  (tm, E_p) f32/bf16   w1_ref: (E_p, th) bf16   b1_ref: (1, th)  f32
    # w2_ref: (th, E_p) bf16       b2_ref: (1, E_p)  f32    o_ref:  (tm, E_p) f32
    # o_ref's block index is constant over the hidden (reduction) axis, so it
    # stays VMEM-resident across it and serves as the f32 accumulator.
    h_idx = pl.program_id(1)

    @pl.when(h_idx == 0)
    def _():
        o_ref[...] = jnp.zeros_like(o_ref)

    # First matmul on MXU (bf16 x bf16 -> f32); cast of x happens on-chip
    # (VPU work hidden under the MXU), bias + ReLU in f32.
    x = x_ref[...].astype(jnp.bfloat16)
    h = jnp.dot(x, w1_ref[...], preferred_element_type=jnp.float32)
    h = jnp.maximum(h + b1_ref[...], 0.0)

    # Second matmul accumulates into the resident f32 output block.
    o_ref[...] += jnp.dot(h.astype(jnp.bfloat16), w2_ref[...],
                          preferred_element_type=jnp.float32)

    @pl.when(h_idx == pl.num_programs(1) - 1)
    def _():
        o_ref[...] += b2_ref[...]


def make_feed_forward(w1, b1, w2, b2):
    """Pads/casts the weights once, picks tiles once, returns a jitted apply(x)."""
    E, H = w1.shape
    assert w2.shape == (H, E)
    E_p = _round_up(E, 128)
    H_p = _round_up(H, 128)

    budget, tm_target = _tpu_vmem_budget()

    # VMEM estimate (double-buffered). x counted at 4 B/elem (worst case: the
    # un-padded f32 fast path), output is f32.
    def act_bytes(tm):
        return 2 * tm * E_p * 4 + 2 * tm * E_p * 4

    def w_bytes(th):
        return 2 * (E_p * th + th * E_p) * 2 + 2 * (th + E_p) * 4

    while tm_target > 256 and act_bytes(tm_target) + w_bytes(128) > budget:
        tm_target //= 2

    if act_bytes(tm_target) + w_bytes(H_p) <= budget:
        th = H_p                      # fully resident weights -> grid_h == 1
    else:
        n = -(-H_p // 256)            # ~256-wide hidden tiles, evenly split
        th = _round_up(-(-H_p // n), 128)
        while th > 128 and act_bytes(tm_target) + w_bytes(th) > budget:
            n += 1
            th = _round_up(-(-H_p // n), 128)
    H_pp = _round_up(H_p, th)
    grid_h = H_pp // th

    # --- pad / cast params ONCE (off the per-call hot path) -----------------
    w1p = jnp.zeros((E_p, H_pp), jnp.bfloat16).at[:E, :H].set(
        w1.astype(jnp.bfloat16))
    b1p = jnp.zeros((1, H_pp), jnp.float32).at[0, :H].set(
        b1.astype(jnp.float32))
    w2p = jnp.zeros((H_pp, E_p), jnp.bfloat16).at[:H, :E].set(
        w2.astype(jnp.bfloat16))
    b2p = jnp.zeros((1, E_p), jnp.float32).at[0, :E].set(
        b2.astype(jnp.float32))

    def apply(x):
        lead = x.shape[:-1]
        assert x.shape[-1] == E
        M = int(math.prod(lead)) if lead else 1
        x2 = x.reshape(M, E)

        # Row tile: as large as the budget allows (arithmetic intensity per
        # weight byte == tm), but keep >= 2 row tiles when M allows so both
        # v7x TensorCores get work on the "parallel" axis.
        if M <= 8:
            tm = _round_up(max(M, 1), 8)
        else:
            tm = min(tm_target, _round_up(-(-M // 2), 8))
        M_p = _round_up(M, tm)
        grid_m = M_p // tm

        need_pad = (M_p != M) or (E_p != E)
        if need_pad:
            xin = jnp.zeros((M_p, E_p), jnp.bfloat16).at[:M, :E].set(
                x2.astype(jnp.bfloat16))
        else:
            xin = x2       # no extra HBM pass; kernel casts to bf16 on-chip

        flops = 4 * M_p * E_p * H_pp                       # two matmuls
        w_hbm = (w1p.size + w2p.size) * 2 * (1 if grid_h == 1 else grid_m)
        bytes_accessed = (xin.size * xin.dtype.itemsize + w_hbm
                          + (b1p.size + b2p.size) * 4 + M_p * E_p * 4)

        out2 = pl.pallas_call(
            ffn_kernel,
            out_shape=jax.ShapeDtypeStruct((M_p, E_p), jnp.float32),
            grid_spec=pltpu.PrefetchScalarGridSpec(
                num_scalar_prefetch=0,
                grid=(grid_m, grid_h),
                in_specs=[
                    pl.BlockSpec((tm, E_p), lambda i, h: (i, 0)),    # x rows
                    pl.BlockSpec((E_p, th), lambda i, h: (0, h)),    # W1 tile
                    pl.BlockSpec((1, th), lambda i, h: (0, h)),      # b1 tile
                    pl.BlockSpec((th, E_p), lambda i, h: (h, 0)),    # W2 tile
                    pl.BlockSpec((1, E_p), lambda i, h: (0, 0)),     # b2
                ],
                out_specs=pl.BlockSpec((tm, E_p), lambda i, h: (i, 0)),
            ),
            compiler_params=pltpu.CompilerParams(
                dimension_semantics=("parallel", "arbitrary"),
                vmem_limit_bytes=budget,
            ),
            cost_estimate=pl.CostEstimate(
                flops=flops, transcendentals=0, bytes_accessed=bytes_accessed),
        )(xin, w1p, b1p, w2p, b2p)

        if need_pad:
            out2 = out2[:M, :E]
        return out2.reshape(*lead, E).astype(x.dtype)

    return jax.jit(apply)


def init_params(key, n_embed):
    """Deterministic params mirroring torch.nn.Linear default init
    (uniform(-1/sqrt(fan_in), 1/sqrt(fan_in)))."""
    hidden = 4 * n_embed
    k1, k2, k3, k4 = jax.random.split(key, 4)
    lim1 = 1.0 / jnp.sqrt(n_embed)
    lim2 = 1.0 / jnp.sqrt(hidden)
    w1 = jax.random.uniform(k1, (n_embed, hidden), jnp.float32, -lim1, lim1)
    b1 = jax.random.uniform(k2, (hidden,), jnp.float32, -lim1, lim1)
    w2 = jax.random.uniform(k3, (hidden, n_embed), jnp.float32, -lim2, lim2)
    b2 = jax.random.uniform(k4, (n_embed,), jnp.float32, -lim2, lim2)
    return w1, b1, w2, b2


if __name__ == "__main__":
    key = jax.random.PRNGKey(0)
    kx, kp = jax.random.split(key)

    B, T, n_embed = 2, 8, 32           # hidden = 4 * n_embed = 128
    x = jax.random.normal(kx, (B, T, n_embed), jnp.float32)
    w1, b1, w2, b2 = init_params(kp, n_embed)

    ffn = make_feed_forward(w1, b1, w2, b2)
    out = jax.block_until_ready(ffn(x))
    assert out.shape == (B, T, n_embed)

    # Reference with the same precision policy (bf16 matmul inputs, f32 accum).
    xb = x.reshape(-1, n_embed).astype(jnp.bfloat16)
    h_ref = jnp.dot(xb, w1.astype(jnp.bfloat16),
                    preferred_element_type=jnp.float32) + b1
    h_ref = jnp.maximum(h_ref, 0.0)
    ref = jnp.dot(h_ref.astype(jnp.bfloat16), w2.astype(jnp.bfloat16),
                  preferred_element_type=jnp.float32) + b2
    ref = ref.reshape(B, T, n_embed)
    assert jnp.allclose(out, ref, atol=1e-3, rtol=1e-3)

    # Loose sanity check against the full-f32 math.
    ref32 = jnp.maximum(x.reshape(-1, n_embed) @ w1 + b1, 0.0) @ w2 + b2
    ref32 = ref32.reshape(B, T, n_embed)
    assert jnp.allclose(out, ref32, atol=5e-2, rtol=5e-2)

    print("KERNEL_OK")
</pallas_src>

<mosaic_0001>
module attributes {stable_mosaic.version = 11 : i64} {
  func.func @ffn_kernel(%arg0: i32, %arg1: i32, %arg2: memref<8x128xbf16, #tpu.memory_space<vmem>>, %arg3: memref<128x128xbf16, #tpu.memory_space<vmem>>, %arg4: memref<1x128xf32, #tpu.memory_space<vmem>>, %arg5: memref<128x128xbf16, #tpu.memory_space<vmem>>, %arg6: memref<1x128xf32, #tpu.memory_space<vmem>>, %arg7: memref<8x128xf32, #tpu.memory_space<vmem>>) attributes {dimension_semantics = [#tpu.dimension_semantics<parallel>, #tpu.dimension_semantics<arbitrary>], iteration_bounds = array<i64: 2, 1>, scalar_prefetch = 0 : i64, scratch_operands = 0 : i64, tpu.core_type = #tpu.core_type<tc>, window_params = [{transform_indices = @transform_0, window_bounds = array<i64: 8, 128>}, {transform_indices = @transform_1, window_bounds = array<i64: 128, 128>}, {transform_indices = @transform_2, window_bounds = array<i64: 1, 128>}, {transform_indices = @transform_3, window_bounds = array<i64: 128, 128>}, {pipeline_mode = #tpu.pipeline_mode<synchronous>, transform_indices = @transform_4, window_bounds = array<i64: 1, 128>}, {transform_indices = @transform_5, window_bounds = array<i64: 8, 128>}]} {
    %c0_i32 = arith.constant 0 : i32
    %0 = arith.cmpi eq, %arg1, %c0_i32 : i32
    %1 = arith.extui %0 : i1 to i32
    %c0_i32_0 = arith.constant 0 : i32
    %2 = arith.cmpi ne, %1, %c0_i32_0 : i32
    scf.if %2 {
      %cst_16 = arith.constant 0.000000e+00 : f32
      %20 = vector.broadcast %cst_16 : f32 to vector<8x128xf32>
      %c0_17 = arith.constant 0 : index
      %c0_18 = arith.constant 0 : index
      %21 = vector.load %arg7[%c0_17, %c0_18] : memref<8x128xf32, #tpu.memory_space<vmem>>, vector<8x128xf32>
      tpu.vector_store %arg7[%c0_17, %c0_18], %20 {strides = array<i32>} : memref<8x128xf32, #tpu.memory_space<vmem>>, vector<8x128xf32>,
    } else {
    }
    %c0 = arith.constant 0 : index
    %c0_1 = arith.constant 0 : index
    %3 = vector.load %arg2[%c0, %c0_1] : memref<8x128xbf16, #tpu.memory_space<vmem>>, vector<8x128xbf16>
    %c0_2 = arith.constant 0 : index
    %c0_3 = arith.constant 0 : index
    %4 = vector.load %arg3[%c0_2, %c0_3] : memref<128x128xbf16, #tpu.memory_space<vmem>>, vector<128x128xbf16>
    %cst = arith.constant dense<0.000000e+00> : vector<8x128xf32>
    %5 = tpu.matmul %3, %4, %cst {dimension_numbers = #tpu.dot_dimension_numbers<[1], [0], [0], [1], [0, 0, 1, 1], [], []>} : vector<8x128xbf16>, vector<128x128xbf16>, vector<8x128xf32> -> vector<8x128xf32>
    %c0_4 = arith.constant 0 : index
    %c0_5 = arith.constant 0 : index
    %6 = vector.load %arg4[%c0_4, %c0_5] : memref<1x128xf32, #tpu.memory_space<vmem>>, vector<1x128xf32>
    %7 = vector.broadcast %6 : vector<1x128xf32> to vector<8x128xf32>
    %8 = arith.addf %5, %7 : vector<8x128xf32>
    %cst_6 = arith.constant 0.000000e+00 : f32
    %9 = vector.broadcast %cst_6 : f32 to vector<8x128xf32>
    %10 = arith.maximumf %8, %9 : vector<8x128xf32>
    %c0_7 = arith.constant 0 : index
    %c0_8 = arith.constant 0 : index
    %11 = vector.load %arg7[%c0_7, %c0_8] : memref<8x128xf32, #tpu.memory_space<vmem>>, vector<8x128xf32>
    %12 = arith.truncf %10 : vector<8x128xf32> to vector<8x128xbf16>
    %c0_9 = arith.constant 0 : index
    %c0_10 = arith.constant 0 : index
    %13 = vector.load %arg5[%c0_9, %c0_10] : memref<128x128xbf16, #tpu.memory_space<vmem>>, vector<128x128xbf16>
    %cst_11 = arith.constant dense<0.000000e+00> : vector<8x128xf32>
    %14 = tpu.matmul %12, %13, %cst_11 {dimension_numbers = #tpu.dot_dimension_numbers<[1], [0], [0], [1], [0, 0, 1, 1], [], []>} : vector<8x128xbf16>, vector<128x128xbf16>, vector<8x128xf32> -> vector<8x128xf32>
    %15 = arith.addf %11, %14 : vector<8x128xf32>
    %c0_12 = arith.constant 0 : index
    %c0_13 = arith.constant 0 : index
    %16 = vector.load %arg7[%c0_12, %c0_13] : memref<8x128xf32, #tpu.memory_space<vmem>>, vector<8x128xf32>
    tpu.vector_store %arg7[%c0_12, %c0_13], %15 {strides = array<i32>} : memref<8x128xf32, #tpu.memory_space<vmem>>, vector<8x128xf32>,
    %c0_i32_14 = arith.constant 0 : i32
    %17 = arith.cmpi eq, %arg1, %c0_i32_14 : i32
    %18 = arith.extui %17 : i1 to i32
    %c0_i32_15 = arith.constant 0 : i32
    %19 = arith.cmpi ne, %18, %c0_i32_15 : i32
    scf.if %19 {
      %c0_16 = arith.constant 0 : index
      %c0_17 = arith.constant 0 : index
      %20 = vector.load %arg7[%c0_16, %c0_17] : memref<8x128xf32, #tpu.memory_space<vmem>>, vector<8x128xf32>
      %c0_18 = arith.constant 0 : index
      %c0_19 = arith.constant 0 : index
      %21 = vector.load %arg6[%c0_18, %c0_19] : memref<1x128xf32, #tpu.memory_space<vmem>>, vector<1x128xf32>
      %22 = vector.broadcast %21 : vector<1x128xf32> to vector<8x128xf32>
      %23 = arith.addf %20, %22 : vector<8x128xf32>
      %c0_20 = arith.constant 0 : index
      %c0_21 = arith.constant 0 : index
      %24 = vector.load %arg7[%c0_20, %c0_21] : memref<8x128xf32, #tpu.memory_space<vmem>>, vector<8x128xf32>
      tpu.vector_store %arg7[%c0_20, %c0_21], %23 {strides = array<i32>} : memref<8x128xf32, #tpu.memory_space<vmem>>, vector<8x128xf32>,
    } else {
    }
    return
  }
  func.func @transform_0(%arg0: i32, %arg1: i32) -> (i32, i32) {
    %c0_i32 = arith.constant 0 : i32
    %c0_i32_0 = arith.constant 0 : i32
    return %arg0, %c0_i32 : i32, i32
  }
  func.func @transform_1(%arg0: i32, %arg1: i32) -> (i32, i32) {
    %c0_i32 = arith.constant 0 : i32
    %c0_i32_0 = arith.constant 0 : i32
    return %c0_i32, %arg1 : i32, i32
  }
  func.func @transform_2(%arg0: i32, %arg1: i32) -> (i32, i32) {
    %c0_i32 = arith.constant 0 : i32
    %c0_i32_0 = arith.constant 0 : i32
    return %c0_i32, %arg1 : i32, i32
  }
  func.func @transform_3(%arg0: i32, %arg1: i32) -> (i32, i32) {
    %c0_i32 = arith.constant 0 : i32
    %c0_i32_0 = arith.constant 0 : i32
    return %arg1, %c0_i32 : i32, i32
  }
  func.func @transform_4(%arg0: i32, %arg1: i32) -> (i32, i32) {
    %c0_i32 = arith.constant 0 : i32
    %c0_i32_0 = arith.constant 0 : i32
    %c0_i32_1 = arith.constant 0 : i32
    return %c0_i32, %c0_i32_0 : i32, i32
  }
  func.func @transform_5(%arg0: i32, %arg1: i32) -> (i32, i32) {
    %c0_i32 = arith.constant 0 : i32
    %c0_i32_0 = arith.constant 0 : i32
    return %arg0, %c0_i32 : i32, i32
  }
}

</mosaic_0001>

<llo_original>
// kernel: apply.1
$region0: #{apply.1}
  #allocation0 [shape = 'u32[]', space=smem, size = 0x4, offset = 0x4, fixed_abs, tag = 'smem constant byte address 0x4 - core index']
  #allocation1 [shape = 'u32[144,128]{1,0:T(1,128)}', space=vmem, size = 0x12000, scoped, tag = 'internal scratch']
  %s0 = inlined_call_operand.vmem [shape: bf16[16,128], index: 0, kind: input, shape index: {}]
  %s1 = inlined_call_operand.hbm [shape: bf16[128,128], index: 1, kind: input, shape index: {}]
  %s2 = inlined_call_operand.vmem [shape: f32[1,128], index: 2, kind: input, shape index: {}]
  %s3 = inlined_call_operand.hbm [shape: bf16[128,128], index: 3, kind: input, shape index: {}]
  %s4 = inlined_call_operand.vmem [shape: f32[1,128], index: 4, kind: input, shape index: {}]
  %s5 = inlined_call_operand.vmem [shape: f32[16,128], index: 5, kind: output, shape index: {}]
  %s6 = sld [smem:[#allocation0]]
  $region69: #{apply.1} parent=0
    _
  %s8 = ssub.s32 1, %s6
  %s9 = scalar_select 0, %s8, %s6
  $region1: #{apply.1} parent=0
    #allocation2 [shape = 'u8[32768]{0}', space=vmem, size = 0x8000, scoped, tag = 'input window, operand 1, single buffered']
    #allocation3 [shape = 's32[2]{0}', space=sflag, size = 0x8, scoped, tag = 'scoped memory for apply.1']
    #allocation4 [shape = 'u8[32768]{0}', space=vmem, size = 0x8000, scoped, tag = 'input window, operand 3, single buffered']
    #allocation5 [shape = 's32[1]{0}', space=sflag, size = 0x4, scoped, tag = 'scoped memory for apply.1']
    %10 = vsyncpa [#allocation3], 0
    %11 = vsyncpa [#allocation5], 0
    loop: start=0, step=1, limit=4
    $region2: #{apply.1} parent=1 // loop_pre_header
      _
    $region3: #{apply.1} parent=1 // loop_header
      %s13 = sphi 0, %s17
      %p14 = scmp.ge.s32.totalorder %s13, 4
      %s20 = sphi 0, %s32
      %s21 = sphi 0, %s28
      %s22 = sphi 0, %s20
      %s23 = sphi 0, %s21
      %s24 = sphi 0, %s22
      %s25 = sphi 0, %s23
      %s35 = sphi 0, %s37
      %s38 = sphi 0, %s35
      %s39 = sphi 0, %s38
      %s55 = sphi 0, %s39
      %s61 = sphi 0, %s63
      %s64 = sphi 0, %s61
      %s65 = sphi 0, %s64
      %s81 = sphi 0, %s65
      %s87 = sphi 0, %s89
      %s90 = sphi 0, %s87
      %s91 = sphi 0, %s90
      %s107 = sphi 0, %s91
      %s113 = sphi 0, %s115
      %s116 = sphi 0, %s113
      %s117 = sphi 0, %s116
      %s133 = sphi 0, %s117
      %s137 = sphi 0, %s137
      %s139 = sphi 0, %s137
      %s140 = sphi 0, %s139
      %s154 = sphi 0, %s140
      %s160 = sphi 0, %s162
      %s163 = sphi 0, %s160
      %s164 = sphi 0, %s163
      %s180 = sphi 0, %s164
    $region4: #{apply.1} parent=1 // loop_header_branch
      %16 = sbr.rel (%p14) target = $region8
    $region5: #{apply.1} parent=1 // loop_body
      %s18 = ssub.s32 %s13, 1
      %s19 = ssub.s32 %s13, 2
      %s26 = sadd.s32 1, %s21
      %p27 = scmp.ge.s32.totalorder %s26, 1
      %s28 = scalar_select %p27, 0, %s26
      %s29 = sadd.s32 1, %s20
      %s30 = scalar_select %p27, %s29, %s20
      %p31 = scmp.ge.s32.totalorder %s30, 2
      %s32 = scalar_select %p31, 0, %s30
      %s33 = ssub.s32 %s20, %s32
      %p34 = scmp.eq.s32.totalorder %s33, 0
      %s36 = sadd.s32 %s35, 1
      %s37 = scalar_select %p34, %s35, %s36
      %p40 = pneg %p34
      %p41 = scmp.eq.s32.totalorder %s13, 1
      %p42 = por %p40, %p41
      %p43 = scmp.ne.s32.totalorder %s35, %s38
      %p44 = scmp.eq.s32.totalorder %s13, 0
      %p45 = por %p43, %p44
      %p46 = scmp.ne.s32.totalorder %s35, %s38
      %p47 = scmp.eq.s32.totalorder %s18, 1
      %p48 = por %p46, %p47
      %p49 = scmp.ne.s32.totalorder %s38, %s39
      %p50 = scmp.eq.s32.totalorder %s18, 0
      %p51 = por %p49, %p50
      %p52 = scmp.ne.s32.totalorder %s38, %s39
      %p53 = scmp.eq.s32.totalorder %s19, 1
      %p54 = por %p52, %p53
      %p56 = scmp.ne.s32.totalorder %s39, %s55
      %p57 = scmp.eq.s32.totalorder %s19, 0
      %p58 = por %p56, %p57
      %s59 = ssub.s32 %s21, %s28
      %p60 = scmp.eq.s32.totalorder %s59, 0
      %s62 = sadd.s32 %s61, 1
      %s63 = scalar_select %p60, %s61, %s62
      %p66 = pneg %p60
      %p67 = scmp.eq.s32.totalorder %s13, 1
      %p68 = por %p66, %p67
      %p69 = scmp.ne.s32.totalorder %s61, %s64
      %p70 = scmp.eq.s32.totalorder %s13, 0
      %p71 = por %p69, %p70
      %p72 = scmp.ne.s32.totalorder %s61, %s64
      %p73 = scmp.eq.s32.totalorder %s18, 1
      %p74 = por %p72, %p73
      %p75 = scmp.ne.s32.totalorder %s64, %s65
      %p76 = scmp.eq.s32.totalorder %s18, 0
      %p77 = por %p75, %p76
      %p78 = scmp.ne.s32.totalorder %s64, %s65
      %p79 = scmp.eq.s32.totalorder %s19, 1
      %p80 = por %p78, %p79
      %p82 = scmp.ne.s32.totalorder %s65, %s81
      %p83 = scmp.eq.s32.totalorder %s19, 0
      %p84 = por %p82, %p83
      %s85 = ssub.s32 %s21, %s28
      %p86 = scmp.eq.s32.totalorder %s85, 0
      %s88 = sadd.s32 %s87, 1
      %s89 = scalar_select %p86, %s87, %s88
      %p92 = pneg %p86
      %p93 = scmp.eq.s32.totalorder %s13, 1
      %p94 = por %p92, %p93
      %p95 = scmp.ne.s32.totalorder %s87, %s90
      %p96 = scmp.eq.s32.totalorder %s13, 0
      %p97 = por %p95, %p96
      %p98 = scmp.ne.s32.totalorder %s87, %s90
      %p99 = scmp.eq.s32.totalorder %s18, 1
      %p100 = por %p98, %p99
      %p101 = scmp.ne.s32.totalorder %s90, %s91
      %p102 = scmp.eq.s32.totalorder %s18, 0
      %p103 = por %p101, %p102
      %p104 = scmp.ne.s32.totalorder %s90, %s91
      %p105 = scmp.eq.s32.totalorder %s19, 1
      %p106 = por %p104, %p105
      %p108 = scmp.ne.s32.totalorder %s91, %s107
      %p109 = scmp.eq.s32.totalorder %s19, 0
      %p110 = por %p108, %p109
      %s111 = ssub.s32 %s21, %s28
      %p112 = scmp.eq.s32.totalorder %s111, 0
      %s114 = sadd.s32 %s113, 1
      %s115 = scalar_select %p112, %s113, %s114
      %p118 = pneg %p112
      %p119 = scmp.eq.s32.totalorder %s13, 1
      %p120 = por %p118, %p119
      %p121 = scmp.ne.s32.totalorder %s113, %s116
      %p122 = scmp.eq.s32.totalorder %s13, 0
      %p123 = por %p121, %p122
      %p124 = scmp.ne.s32.totalorder %s113, %s116
      %p125 = scmp.eq.s32.totalorder %s18, 1
      %p126 = por %p124, %p125
      %p127 = scmp.ne.s32.totalorder %s116, %s117
      %p128 = scmp.eq.s32.totalorder %s18, 0
      %p129 = por %p127, %p128
      %p130 = scmp.ne.s32.totalorder %s116, %s117
      %p131 = scmp.eq.s32.totalorder %s19, 1
      %p132 = por %p130, %p131
      %p134 = scmp.ne.s32.totalorder %s117, %s133
      %p135 = scmp.eq.s32.totalorder %s19, 0
      %p136 = por %p134, %p135
      %s138 = sadd.s32 %s137, 1
      %p141 = scmp.eq.s32.totalorder %s13, 1
      %p142 = scmp.ne.s32.totalorder %s137, %s139
      %p143 = scmp.eq.s32.totalorder %s13, 0
      %p144 = por %p142, %p143
      %p145 = scmp.ne.s32.totalorder %s137, %s139
      %p146 = scmp.eq.s32.totalorder %s18, 1
      %p147 = por %p145, %p146
      %p148 = scmp.ne.s32.totalorder %s139, %s140
      %p149 = scmp.eq.s32.totalorder %s18, 0
      %p150 = por %p148, %p149
      %p151 = scmp.ne.s32.totalorder %s139, %s140
      %p152 = scmp.eq.s32.totalorder %s19, 1
      %p153 = por %p151, %p152
      %p155 = scmp.ne.s32.totalorder %s140, %s154
      %p156 = scmp.eq.s32.totalorder %s19, 0
      %p157 = por %p155, %p156
      %s158 = ssub.s32 %s20, %s32
      %p159 = scmp.eq.s32.totalorder %s158, 0
      %s161 = sadd.s32 %s160, 1
      %s162 = scalar_select %p159, %s160, %s161
      %p165 = pneg %p159
      %p166 = scmp.eq.s32.totalorder %s13, 1
      %p167 = por %p165, %p166
      %p168 = scmp.ne.s32.totalorder %s160, %s163
      %p169 = scmp.eq.s32.totalorder %s13, 0
      %p170 = por %p168, %p169
      %p171 = scmp.ne.s32.totalorder %s160, %s163
      %p172 = scmp.eq.s32.totalorder %s18, 1
      %p173 = por %p171, %p172
      %p174 = scmp.ne.s32.totalorder %s163, %s164
      %p175 = scmp.eq.s32.totalorder %s18, 0
      %p176 = por %p174, %p175
      %p177 = scmp.ne.s32.totalorder %s163, %s164
      %p178 = scmp.eq.s32.totalorder %s19, 1
      %p179 = por %p177, %p178
      %p181 = scmp.ne.s32.totalorder %s164, %s180
      %p182 = scmp.eq.s32.totalorder %s19, 0
      %p183 = por %p181, %p182
      %p184 = scmp.le.s32.totalorder 1, %s13
      %p185 = scmp.lt.s32.totalorder %s13, 3
      %p186 = pnand %p184, %p185
      %p187 = pneg %p186
      // Predicated region
      $region9: #{apply.1} parent=5 // pred_check
        _
      $region10: #{apply.1} parent=5 // pred_check_branch
        %189 = sbr.rel (%p186) target = $region12
      $region11: #{apply.1} parent=5 // pred_region
        %s190 = ssub.s32 %s13, 1
        // Predicated region
        $region13: #{apply.1} parent=11 // pred_check
          %p191 = pneg %p77
        $region14: #{apply.1} parent=11 // pred_check_branch
          %193 = sbr.rel (%p191) target = $region16
        $region15: #{apply.1} parent=11 // pred_region
          %s195 = ssub.s32 1024, 1024
          %196 = vsyncadd [#allocation3], %s195
          %s197 = smul.addr %s23, 64
          %s198 = scalar_lea.hbm %s1, %s197
          %s199 = sshll.u32 [#allocation2], 4
          %s200 = int_to_ptr.vmem [resolvable:$true] %s199
          %205 = dma.hbm_to_vmem [thread:$0]  %s198, 1024, %s200, [#allocation3], 64, 64, 4
        $region16: #{apply.1} parent=11 // pred_fallthru
          _
        // Predicated region
        $region17: #{apply.1} parent=11 // pred_check
          %p206 = pneg %p103
        $region18: #{apply.1} parent=11 // pred_check_branch
          %208 = sbr.rel (%p206) target = $region20
        $region19: #{apply.1} parent=11 // pred_region
          %p209 = scmp.lt.s32.totalorder %s23, 0
          %s210 = scalar_select %p209, %s23, 0
          %s211 = scalar_lea.vmem %s2, %s210
        $region20: #{apply.1} parent=11 // pred_fallthru
          _
        // Predicated region
        $region21: #{apply.1} parent=11 // pred_check
          %p212 = pneg %p129
        $region22: #{apply.1} parent=11 // pred_check_branch
          %214 = sbr.rel (%p212) target = $region24
        $region23: #{apply.1} parent=11 // pred_region
          %s215 = smul.u32 16, %s23
          %s217 = ssub.s32 1024, 1024
          %218 = vsyncadd [#allocation5], %s217
          %s219 = smul.addr %s215, 64
          %s220 = scalar_lea.hbm %s3, %s219
          %s221 = sshll.u32 [#allocation4], 4
          %s222 = int_to_ptr.vmem [resolvable:$true] %s221
          %227 = dma.hbm_to_vmem [thread:$0]  %s220, 1024, %s222, [#allocation5], 64, 64, 4
        $region24: #{apply.1} parent=11 // pred_fallthru
          _
        // Predicated region
        $region25: #{apply.1} parent=11 // pred_check
          %p228 = pneg %p150
        $region26: #{apply.1} parent=11 // pred_check_branch
          %230 = sbr.rel (%p228) target = $region28
        $region27: #{apply.1} parent=11 // pred_region
          _
        $region28: #{apply.1} parent=11 // pred_fallthru
          _
      $region12: #{apply.1} parent=5 // pred_fallthru
        _
      %p231 = scmp.lt.s32.totalorder %s13, 2
      // Predicated region
      $region29: #{apply.1} parent=5 // pred_check
        %p232 = pneg %p231
      $region30: #{apply.1} parent=5 // pred_check_branch
        %234 = sbr.rel (%p232) target = $region32
      $region31: #{apply.1} parent=5 // pred_region
        // Predicated region
        $region33: #{apply.1} parent=31 // pred_check
          %p235 = pneg %p45
        $region34: #{apply.1} parent=31 // pred_check_branch
          %237 = sbr.rel (%p235) target = $region36
        $region35: #{apply.1} parent=31 // pred_region
          %p238 = scmp.lt.s32.totalorder %s20, 1
          %s239 = scalar_select %p238, %s20, 1
          %s240 = smul.addr %s239, 4
          %s241 = scalar_lea.vmem %s0, %s240
        $region36: #{apply.1} parent=31 // pred_fallthru
          _
      $region32: #{apply.1} parent=5 // pred_fallthru
        _
      %p242 = scmp.le.s32.totalorder 1, %s13
      %p243 = scmp.lt.s32.totalorder %s13, 3
      %p244 = pnand %p242, %p243
      %p245 = pneg %p244
      // Predicated region
      $region37: #{apply.1} parent=5 // pred_check
        _
      $region38: #{apply.1} parent=5 // pred_check_branch
        %247 = sbr.rel (%p244) target = $region40
      $region39: #{apply.1} parent=5 // pred_region
        %s248 = ssub.s32 %s13, 1
        // Predicated region
        $region41: #{apply.1} parent=39 // pred_check
          %p249 = pneg %p77
        $region42: #{apply.1} parent=39 // pred_check_branch
          %251 = sbr.rel (%p249) target = $region44
        $region43: #{apply.1} parent=39 // pred_region
          %252 = dma.done [#allocation3], 1024
        $region44: #{apply.1} parent=39 // pred_fallthru
          _
        // Predicated region
        $region45: #{apply.1} parent=39 // pred_check
          %p253 = pneg %p129
        $region46: #{apply.1} parent=39 // pred_check_branch
          %255 = sbr.rel (%p253) target = $region48
        $region47: #{apply.1} parent=39 // pred_region
          %256 = dma.done [#allocation5], 1024
        $region48: #{apply.1} parent=39 // pred_fallthru
          _
        %p257 = scmp.lt.s32.totalorder %s22, 1
        %s258 = scalar_select %p257, %s22, 1
        %s259 = smul.addr %s258, 4
        %s260 = scalar_lea.vmem %s0, %s259
        %p261 = pneg %p51
        %p262 = pneg %p48
        %p263 = pneg %p77
        %p264 = pneg %p74
        %p265 = scmp.lt.s32.totalorder %s23, 0
        %s266 = scalar_select %p265, %s23, 0
        %s267 = scalar_lea.vmem %s2, %s266
        %p268 = pneg %p103
        %p269 = pneg %p100
        %p270 = pneg %p129
        %p271 = pneg %p126
        %p272 = pneg %p150
        %p273 = pneg %p147
        %p274 = pneg %p176
        %p275 = pneg %p173
        %p276 = scmp.lt.s32.totalorder %s22, 1
        %s277 = scalar_select %p276, %s22, 1
        %s278 = smul.addr %s277, 8
        %s279 = scalar_lea.vmem %s5, %s278
        %p280 = scmp.lt.s32.totalorder %s22, 1
        %s281 = scalar_select %p280, %s22, 1
        %s282 = smul.addr %s281, 4
        %s283 = scalar_lea.vmem %s0, %s282
        %p284 = scmp.lt.s32.totalorder %s23, 0
        %s285 = scalar_select %p284, %s23, 0
        %s286 = scalar_lea.vmem %s2, %s285
        %s287 = smul.u32 16, %s23
        %p288 = scmp.lt.s32.totalorder %s22, 1
        %s289 = scalar_select %p288, %s22, 1
        %s290 = smul.addr %s289, 8
        %s291 = scalar_lea.vmem %s5, %s290
        %p293 = scmp.eq.s32.totalorder %s23, 0
        // Predicated region
        $region49: #{apply.1} parent=39 // pred_check
          %p294 = pneg %p293
        $region50: #{apply.1} parent=39 // pred_check_branch
          %296 = sbr.rel (%p294) target = $region52
        $region51: #{apply.1} parent=39 // pred_region
          %297 = vst [vmem:[%s291] sm:$0xff] 0.0
        $region52: #{apply.1} parent=39 // pred_fallthru
          _
        %v298 = vld [vmem:[%s283] sm:$0xf]
        %v299 = vld [vmem:[#allocation2] sm:$0xf]
        %v300 = vld [vmem:[#allocation2 + $0x4] sm:$0xf]
        %v301 = vld [vmem:[#allocation2 + $0x8] sm:$0xf]
        %v302 = vld [vmem:[#allocation2 + $0xc] sm:$0xf]
        %v303 = vld [vmem:[#allocation2 + $0x10] sm:$0xf]
        %v304 = vld [vmem:[#allocation2 + $0x14] sm:$0xf]
        %v305 = vld [vmem:[#allocation2 + $0x18] sm:$0xf]
        %v306 = vld [vmem:[#allocation2 + $0x1c] sm:$0xf]
        %v307 = vld [vmem:[#allocation2 + $0x20] sm:$0xf]
        %v308 = vld [vmem:[#allocation2 + $0x24] sm:$0xf]
        %v309 = vld [vmem:[#allocation2 + $0x28] sm:$0xf]
        %v310 = vld [vmem:[#allocation2 + $0x2c] sm:$0xf]
        %v311 = vld [vmem:[#allocation2 + $0x30] sm:$0xf]
        %v312 = vld [vmem:[#allocation2 + $0x34] sm:$0xf]
        %v313 = vld [vmem:[#allocation2 + $0x38] sm:$0xf]
        %v314 = vld [vmem:[#allocation2 + $0x3c] sm:$0xf]
        %v315 = vld [vmem:[%s286] sm:$0x1]
        %v317 = vlaneseq
        %v318 = vshrl.u32 %v317, 7
        %v319 = vsub.s32 0, %v318
        %v320 = vrot.slane %v315, %v319
        %v338 = vunpack.c.l.b16 %v299
        %v339 = vunpack.c.l.b16 %v300
        %v340 = vunpack.c.l.b16 %v301
        %v341 = vunpack.c.l.b16 %v302
        %v342 = vunpack.c.l.b16 %v303
        %v343 = vunpack.c.l.b16 %v304
        %v344 = vunpack.c.l.b16 %v305
        %v345 = vunpack.c.l.b16 %v306
        %v346 = vunpack.c.l.b16 %v307
        %v347 = vunpack.c.l.b16 %v308
        %v348 = vunpack.c.l.b16 %v309
        %v349 = vunpack.c.l.b16 %v310
        %v350 = vunpack.c.l.b16 %v311
        %v351 = vunpack.c.l.b16 %v312
        %v352 = vunpack.c.l.b16 %v313
        %v353 = vunpack.c.l.b16 %v314
        %v354 = vpack.c.b16 %v339, %v338
        %v355 = vpack.c.b16 %v341, %v340
        %v356 = vpack.c.b16 %v343, %v342
        %v357 = vpack.c.b16 %v345, %v344
        %v358 = vpack.c.b16 %v347, %v346
        %v359 = vpack.c.b16 %v349, %v348
        %v360 = vpack.c.b16 %v351, %v350
        %v361 = vpack.c.b16 %v353, %v352
        %370 = vmatprep.subr.bf16.mxu0 0
        %371 = vmatpush1.bf16.msra.mxu0 %v361
        %372 = vmatprep.subr.bf16.mxu0 0
        %373 = vmatpush1.bf16.msra.mxu0 %v360
        %374 = vmatprep.subr.bf16.mxu0 0
        %375 = vmatpush1.bf16.msra.mxu0 %v359
        %376 = vmatprep.subr.bf16.mxu0 0
        %377 = vmatpush1.bf16.msra.mxu0 %v358
        %378 = vmatprep.subr.bf16.mxu0 0
        %379 = vmatpush1.bf16.msra.mxu0 %v357
        %380 = vmatprep.subr.bf16.mxu0 0
        %381 = vmatpush1.bf16.msra.mxu0 %v356
        %382 = vmatprep.subr.bf16.mxu0 0
        %383 = vmatpush1.bf16.msra.mxu0 %v355
        %384 = vmatprep.subr.bf16.mxu0 0
        %385 = vmatpush1.bf16.msra.mxu0 %v354
        %386 = vmatprep.subr.bf16.mxu0 0
        %387 = vmatpush2.bf16.msra.mxu0 0
        %388 = vmatprep.subr.bf16.mxu0 0
        %389 = vmatpush2.bf16.msra.mxu0 0
        %390 = vmatprep.subr.bf16.mxu0 0
        %391 = vmatpush2.bf16.msra.mxu0 0
        %392 = vmatprep.subr.bf16.mxu0 0
        %393 = vmatpush2.bf16.msra.mxu0 0
        %394 = vmatprep.subr.bf16.mxu0 0
        %395 = vmatpush2.bf16.msra.mxu0 0
        %396 = vmatprep.subr.bf16.mxu0 0
        %397 = vmatpush2.bf16.msra.mxu0 0
        %398 = vmatprep.subr.bf16.mxu0 0
        %399 = vmatpush2.bf16.msra.mxu0 0
        %400 = vmatprep.subr.bf16.mxu0 0
        %401 = vmatpush2.bf16.msra.mxu0 0
        %402 = vmatprep.mubr.bf16.mxu0 0
        %403 = vmatmul.mubr.bf16.gmra.mxu0 %v298
        %v404 = vpop.f32.mrf.mxu0
        %v405 = vadd.f32 %v320, %v404
        %v406 = vpop.f32.mrf.mxu0
        %v407 = vpop.f32.mrf.mxu0
        %v408 = vpop.f32.mrf.mxu0
        %409 = vdwg.mxu0
        %v410 = vmax.f32 %v405, 0.0
        %v411 = vld [vmem:[%s291] sm:$0xff]
        %v412 = vpack.c.bf16 %v410, %v410
        %v413 = vld [vmem:[#allocation4] sm:$0xf]
        %v414 = vld [vmem:[#allocation4 + $0x4] sm:$0xf]
        %v415 = vld [vmem:[#allocation4 + $0x8] sm:$0xf]
        %v416 = vld [vmem:[#allocation4 + $0xc] sm:$0xf]
        %v417 = vld [vmem:[#allocation4 + $0x10] sm:$0xf]
        %v418 = vld [vmem:[#allocation4 + $0x14] sm:$0xf]
        %v419 = vld [vmem:[#allocation4 + $0x18] sm:$0xf]
        %v420 = vld [vmem:[#allocation4 + $0x1c] sm:$0xf]
        %v421 = vld [vmem:[#allocation4 + $0x20] sm:$0xf]
        %v422 = vld [vmem:[#allocation4 + $0x24] sm:$0xf]
        %v423 = vld [vmem:[#allocation4 + $0x28] sm:$0xf]
        %v424 = vld [vmem:[#allocation4 + $0x2c] sm:$0xf]
        %v425 = vld [vmem:[#allocation4 + $0x30] sm:$0xf]
        %v426 = vld [vmem:[#allocation4 + $0x34] sm:$0xf]
        %v427 = vld [vmem:[#allocation4 + $0x38] sm:$0xf]
        %v428 = vld [vmem:[#allocation4 + $0x3c] sm:$0xf]
        %v445 = vunpack.c.l.b16 %v413
        %v446 = vunpack.c.l.b16 %v414
        %v447 = vunpack.c.l.b16 %v415
        %v448 = vunpack.c.l.b16 %v416
        %v449 = vunpack.c.l.b16 %v417
        %v450 = vunpack.c.l.b16 %v418
        %v451 = vunpack.c.l.b16 %v419
        %v452 = vunpack.c.l.b16 %v420
        %v453 = vunpack.c.l.b16 %v421
        %v454 = vunpack.c.l.b16 %v422
        %v455 = vunpack.c.l.b16 %v423
        %v456 = vunpack.c.l.b16 %v424
        %v457 = vunpack.c.l.b16 %v425
        %v458 = vunpack.c.l.b16 %v426
        %v459 = vunpack.c.l.b16 %v427
        %v460 = vunpack.c.l.b16 %v428
        %v461 = vpack.c.b16 %v446, %v445
        %v462 = vpack.c.b16 %v448, %v447
        %v463 = vpack.c.b16 %v450, %v449
        %v464 = vpack.c.b16 %v452, %v451
        %v465 = vpack.c.b16 %v454, %v453
        %v466 = vpack.c.b16 %v456, %v455
        %v467 = vpack.c.b16 %v458, %v457
        %v468 = vpack.c.b16 %v460, %v459
        %477 = vmatprep.subr.bf16.mxu0 0
        %478 = vmatpush1.bf16.msra.mxu0 %v468
        %479 = vmatprep.subr.bf16.mxu0 0
        %480 = vmatpush1.bf16.msra.mxu0 %v467
        %481 = vmatprep.subr.bf16.mxu0 0
        %482 = vmatpush1.bf16.msra.mxu0 %v466
        %483 = vmatprep.subr.bf16.mxu0 0
        %484 = vmatpush1.bf16.msra.mxu0 %v465
        %485 = vmatprep.subr.bf16.mxu0 0
        %486 = vmatpush1.bf16.msra.mxu0 %v464
        %487 = vmatprep.subr.bf16.mxu0 0
        %488 = vmatpush1.bf16.msra.mxu0 %v463
        %489 = vmatprep.subr.bf16.mxu0 0
        %490 = vmatpush1.bf16.msra.mxu0 %v462
        %491 = vmatprep.subr.bf16.mxu0 0
        %492 = vmatpush1.bf16.msra.mxu0 %v461
        %493 = vmatprep.subr.bf16.mxu0 0
        %494 = vmatpush2.bf16.msra.mxu0 0
        %495 = vmatprep.subr.bf16.mxu0 0
        %496 = vmatpush2.bf16.msra.mxu0 0
        %497 = vmatprep.subr.bf16.mxu0 0
        %498 = vmatpush2.bf16.msra.mxu0 0
        %499 = vmatprep.subr.bf16.mxu0 0
        %500 = vmatpush2.bf16.msra.mxu0 0
        %501 = vmatprep.subr.bf16.mxu0 0
        %502 = vmatpush2.bf16.msra.mxu0 0
        %503 = vmatprep.subr.bf16.mxu0 0
        %504 = vmatpush2.bf16.msra.mxu0 0
        %505 = vmatprep.subr.bf16.mxu0 0
        %506 = vmatpush2.bf16.msra.mxu0 0
        %507 = vmatprep.subr.bf16.mxu0 0
        %508 = vmatpush2.bf16.msra.mxu0 0
        %509 = vmatprep.mubr.bf16.mxu0 0
        %510 = vmatmul.mubr.bf16.gmra.mxu0 %v412
        %v511 = vpop.f32.mrf.mxu0
        %v512 = vadd.f32 0.0, %v511
        %v513 = vpop.f32.mrf.mxu0
        %v514 = vpop.f32.mrf.mxu0
        %v515 = vpop.f32.mrf.mxu0
        %516 = vdwg.mxu0
        %v517 = vadd.f32 %v411, %v512
        %518 = vst [vmem:[%s291] sm:$0xff] %v517
        // Predicated region
        $region53: #{apply.1} parent=39 // pred_check
          %p519 = pneg %p293
        $region54: #{apply.1} parent=39 // pred_check_branch
          %521 = sbr.rel (%p519) target = $region56
        $region55: #{apply.1} parent=39 // pred_region
          %v522 = vld [vmem:[%s291] sm:$0xff]
          %v523 = vld [vmem:[%s4] sm:$0x1]
          %v525 = vlaneseq
          %v526 = vshrl.u32 %v525, 7
          %v527 = vsub.s32 0, %v526
          %v528 = vrot.slane %v523, %v527
          %v530 = vadd.f32 %v522, %v528
          %531 = vst [vmem:[%s291] sm:$0xff] %v530
        $region56: #{apply.1} parent=39 // pred_fallthru
          _
        %p532 = scmp.lt.s32.totalorder %s22, 1
        %s533 = scalar_select %p532, %s22, 1
        %s534 = smul.addr %s533, 8
        %s535 = scalar_lea.vmem %s5, %s534
        // Predicated region
        $region57: #{apply.1} parent=39 // pred_check
          %p536 = pneg %p173
        $region58: #{apply.1} parent=39 // pred_check_branch
          %538 = sbr.rel (%p536) target = $region60
        $region59: #{apply.1} parent=39 // pred_region
          _
        $region60: #{apply.1} parent=39 // pred_fallthru
          _
      $region40: #{apply.1} parent=5 // pred_fallthru
        _
      %p539 = scmp.le.s32.totalorder 2, %s13
      // Predicated region
      $region61: #{apply.1} parent=5 // pred_check
        %p540 = pneg %p539
      $region62: #{apply.1} parent=5 // pred_check_branch
        %542 = sbr.rel (%p540) target = $region64
      $region63: #{apply.1} parent=5 // pred_region
        %s543 = ssub.s32 %s13, 2
        // Predicated region
        $region65: #{apply.1} parent=63 // pred_check
          %p544 = pneg %p179
        $region66: #{apply.1} parent=63 // pred_check_branch
          %546 = sbr.rel (%p544) target = $region68
        $region67: #{apply.1} parent=63 // pred_region
          %p547 = scmp.lt.s32.totalorder %s24, 1
          %s548 = scalar_select %p547, %s24, 1
          %s549 = smul.addr %s548, 8
          %s550 = scalar_lea.vmem %s5, %s549
        $region68: #{apply.1} parent=63 // pred_fallthru
          _
      $region64: #{apply.1} parent=5 // pred_fallthru
        _
    $region6: #{apply.1} parent=1 // loop_footer
      %s17 = sadd.s32 1, %s13
    $region7: #{apply.1} parent=1 // loop_footer_branch
      %12 = sbr.rel target = $region3
    $region8: #{apply.1} parent=1 // loop_exit
      _
    %551 = vsyncpa [#allocation3], 1
    %s552 = scalar_lea.sflag [#allocation3], 1
    %553 = vsyncpa %s552, 1
    %554 = vsyncpa [#allocation5], 1

</llo_original>
